<compile_context>
chip_gen: v7x
topology: tpu7x:2x2x1
jax: 0.10.0
libtpu: 0.0.40
codegen_flags: <defaults>
</compile_context>

<pallas_src>
import functools

import jax
import jax.numpy as jnp
from jax.experimental import pallas as pl
from jax.experimental.pallas import tpu as pltpu


def _round_up(v, m):
    return (v + m - 1) // m * m


# --------------------------------------------------------------------------
# Pallas kernel
# --------------------------------------------------------------------------
def _proxy_loss_kernel(x_ref, pnT_ref, y_ref, sw_ref, bias_ref,
                       loss_ref, acc_ref, *,
                       inv_temp, inv_n, n_classes, batch, tb, nb_inner):
    """One batch tile: fused cosine-sim + proxy loss + accuracy partial sums."""
    c = pl.program_id(0)          # parallel (core) axis
    i = pl.program_id(1)          # inner reduction axis over batch tiles

    @pl.when(i == 0)
    def _():
        loss_ref[...] = jnp.zeros_like(loss_ref)
        acc_ref[...] = jnp.zeros_like(acc_ref)

    block = c * nb_inner + i                          # global batch-tile index
    row = (jax.lax.broadcasted_iota(jnp.int32, (tb, 1), 0) + block * tb)
    rvalid = (row < batch).astype(jnp.float32)        # (TB, 1)

    x = x_ref[...]                                    # (TB, D) f32
    if batch % tb != 0:
        # Ragged last block: zero OOB rows so no garbage enters exp/log/rsqrt.
        x = jnp.where(row < batch, x, jnp.float32(0.0))

    # Row-wise L2 normalisation of x; proxies arrive pre-normalized.
    xn = x * jax.lax.rsqrt(jnp.sum(x * x, axis=-1, keepdims=True) + 1e-12)

    # Cosine similarity: plain (TB, D) @ (D, Pp) MXU contraction.
    sim = jnp.dot(xn, pnT_ref[...], preferred_element_type=jnp.float32)

    y = y_ref[...]                                    # (TB, 1) int32
    col = jax.lax.broadcasted_iota(jnp.int32, sim.shape, 1)

    # Numerator term: sim[i, y_i] via a one-hot row gather.
    onehot = (col == y).astype(jnp.float32)
    s_target = jnp.sum(sim * onehot, axis=-1, keepdims=True)          # (TB, 1)

    # Weighted softmax denominator.  sw = w/T per column, bias = -1e30 on the
    # padded proxy columns (so they contribute exp(-1e30) == 0 exactly).
    den = jnp.sum(jnp.exp(sim * sw_ref[...] + bias_ref[...]),
                  axis=-1, keepdims=True) + 1e-8                       # (TB, 1)

    # -log(exp(s_target / T) / den) == log(den) - s_target / T
    loss_i = jnp.log(den) - s_target * inv_temp                        # (TB, 1)

    # Prediction: argmax over the first n_classes proxies (first occurrence),
    # identical to argmax of the classify() probabilities.
    sim_cls = jnp.where(col < n_classes, sim, jnp.float32(-1e30))
    max_val = jnp.max(sim_cls, axis=-1, keepdims=True)
    idx_f = jnp.where(sim_cls == max_val, col.astype(jnp.float32),
                      jnp.float32(1e9))
    pred_f = jnp.min(idx_f, axis=-1, keepdims=True)                    # (TB, 1)
    correct = (pred_f == y.astype(jnp.float32)).astype(jnp.float32)

    # Accumulate directly into the resident per-core output blocks.
    loss_part = jnp.sum(loss_i * rvalid, axis=0, keepdims=True)        # (1, 1)
    acc_part = jnp.sum(correct * rvalid, axis=0, keepdims=True)        # (1, 1)
    loss_ref[...] += loss_part.reshape(1, 1, 1) * inv_n
    acc_ref[...] += acc_part.reshape(1, 1, 1) * inv_n


# --------------------------------------------------------------------------
# Wrapper
# --------------------------------------------------------------------------
def proxy_loss(x, y, proxies, *, temperature, n_classes,
               weight_protected_attributes, block_b=512):
    """Returns (loss.mean(), accuracy) exactly like ProxyLoss.forward."""
    x = x.astype(jnp.float32)
    proxies = proxies.astype(jnp.float32)
    y = y.astype(jnp.int32)

    B, D = x.shape
    P, _ = proxies.shape
    inv_temp = 1.0 / float(temperature)

    # ---- one-time (tiny) proxy prep, hoisted out of the grid loop ----------
    Pp = _round_up(P, 128)                 # lane-aligned proxy axis
    pn = proxies * jax.lax.rsqrt(
        jnp.sum(proxies * proxies, axis=1, keepdims=True) + 1e-12)
    pnT = jnp.pad(pn.T, ((0, 0), (0, Pp - P)))                     # (D, Pp)

    # Per-column softmax scale (w/T) and additive bias (-1e30 on padded cols).
    w = jnp.concatenate([
        jnp.ones((n_classes,), jnp.float32),
        jnp.full((P - n_classes,), float(weight_protected_attributes),
                 jnp.float32),
        jnp.zeros((Pp - P,), jnp.float32),
    ]).reshape(1, Pp) * inv_temp
    bias = jnp.where(jnp.arange(Pp) < P, 0.0, -1e30).astype(
        jnp.float32).reshape(1, Pp)

    y2 = y.reshape(B, 1)

    # ---- tiling -------------------------------------------------------------
    # Batch tile: as large as possible (sublane aligned), capped so the x
    # double-buffer stays around <= 8 MiB of scoped VMEM.
    tb_cap = max(8, ((8 << 20) // (2 * max(D, 1) * 4)) // 8 * 8)
    TB = max(8, min(_round_up(B, 8), block_b, tb_cap))
    nb_total = -(-B // TB)                 # ceil-div; last block may be ragged
    # Shard batch tiles across TensorCores (v7x has 2) when it divides evenly;
    # each parallel index has its own output row, so there is no race.
    n_par = 2 if (nb_total >= 2 and nb_total % 2 == 0) else 1
    nb_inner = nb_total // n_par

    kernel = functools.partial(
        _proxy_loss_kernel,
        inv_temp=inv_temp, inv_n=1.0 / float(B),
        n_classes=int(n_classes), batch=int(B), tb=int(TB),
        nb_inner=int(nb_inner))

    loss, acc = pl.pallas_call(
        kernel,
        out_shape=(jax.ShapeDtypeStruct((n_par, 1, 1), jnp.float32),
                   jax.ShapeDtypeStruct((n_par, 1, 1), jnp.float32)),
        grid_spec=pltpu.PrefetchScalarGridSpec(
            num_scalar_prefetch=0,
            grid=(n_par, nb_inner),
            in_specs=[
                pl.BlockSpec((TB, D), lambda c, i: (c * nb_inner + i, 0)),  # x
                pl.BlockSpec((D, Pp), lambda c, i: (0, 0)),   # normalized P^T
                pl.BlockSpec((TB, 1), lambda c, i: (c * nb_inner + i, 0)),  # y
                pl.BlockSpec((1, Pp), lambda c, i: (0, 0)),   # w / T
                pl.BlockSpec((1, Pp), lambda c, i: (0, 0)),   # pad bias
            ],
            out_specs=(pl.BlockSpec((1, 1, 1), lambda c, i: (c, 0, 0)),
                       pl.BlockSpec((1, 1, 1), lambda c, i: (c, 0, 0))),
        ),
        compiler_params=pltpu.CompilerParams(
            dimension_semantics=("parallel", "arbitrary")),
    )(x, pnT, y2, w, bias)

    # Reduce per-core partials (n_par is 1 or 2).
    return jnp.sum(loss), jnp.sum(acc)


# --------------------------------------------------------------------------
# Pure-JAX reference (mirrors the PyTorch module)
# --------------------------------------------------------------------------
def proxy_loss_reference(x, y, proxies, *, temperature, n_classes,
                         weight_protected_attributes):
    x = x.astype(jnp.float32)
    proxies = proxies.astype(jnp.float32)
    xn = x / jnp.sqrt(jnp.sum(x * x, axis=1, keepdims=True) + 1e-12)
    pn = proxies / jnp.sqrt(jnp.sum(proxies * proxies, axis=1, keepdims=True)
                            + 1e-12)
    sim = xn @ pn.T
    B, P = sim.shape
    s_t = sim[jnp.arange(B), y]
    w = jnp.concatenate([
        jnp.ones((n_classes,), jnp.float32),
        jnp.full((P - n_classes,), weight_protected_attributes, jnp.float32),
    ])
    den = jnp.sum(jnp.exp(sim * w / temperature), axis=1) + 1e-8
    loss = -jnp.log(jnp.exp(s_t / temperature) / den)
    preds = jnp.argmax(sim[:, :n_classes], axis=1)
    acc = jnp.mean((preds == y).astype(jnp.float32))
    return loss.mean(), acc


# --------------------------------------------------------------------------
if __name__ == "__main__":
    key = jax.random.PRNGKey(0)
    kx, kp, ky = jax.random.split(key, 3)

    # Small shapes implied by the module: batch of features, proxy bank with
    # n_classes class-proxies plus protected-attribute proxies.
    B, D = 8, 32
    n_classes, n_protected = 6, 4
    P = n_classes + n_protected
    temperature = 0.5
    weight_protected_attributes = 0.3

    x = jax.random.normal(kx, (B, D), jnp.float32)
    proxies = jax.random.normal(kp, (P, D), jnp.float32)
    y = jax.random.randint(ky, (B,), 0, n_classes, jnp.int32)

    loss, acc = proxy_loss(
        x, y, proxies, temperature=temperature, n_classes=n_classes,
        weight_protected_attributes=weight_protected_attributes)
    loss, acc = jax.block_until_ready((loss, acc))

    loss_ref, acc_ref = proxy_loss_reference(
        x, y, proxies, temperature=temperature, n_classes=n_classes,
        weight_protected_attributes=weight_protected_attributes)

    assert jnp.isfinite(loss) and jnp.isfinite(acc), (loss, acc)
    assert jnp.allclose(loss, loss_ref, rtol=2e-3, atol=2e-3), (loss, loss_ref)
    assert jnp.allclose(acc, acc_ref, atol=1e-6), (acc, acc_ref)
    print("KERNEL_OK")
</pallas_src>

<mosaic_0001>
module attributes {stable_mosaic.version = 11 : i64} {
  func.func @_proxy_loss_kernel(%arg0: i32, %arg1: i32, %arg2: memref<8x32xf32, #tpu.memory_space<vmem>>, %arg3: memref<32x128xf32, #tpu.memory_space<vmem>>, %arg4: memref<8x1xi32, #tpu.memory_space<vmem>>, %arg5: memref<1x128xf32, #tpu.memory_space<vmem>>, %arg6: memref<1x128xf32, #tpu.memory_space<vmem>>, %arg7: memref<1x1x1xf32, #tpu.memory_space<vmem>>, %arg8: memref<1x1x1xf32, #tpu.memory_space<vmem>>) attributes {dimension_semantics = [#tpu.dimension_semantics<parallel>, #tpu.dimension_semantics<arbitrary>], iteration_bounds = array<i64: 1, 1>, scalar_prefetch = 0 : i64, scratch_operands = 0 : i64, tpu.core_type = #tpu.core_type<tc>, window_params = [{transform_indices = @transform_0, window_bounds = array<i64: 8, 32>}, {pipeline_mode = #tpu.pipeline_mode<synchronous>, transform_indices = @transform_1, window_bounds = array<i64: 32, 128>}, {transform_indices = @transform_2, window_bounds = array<i64: 8, 1>}, {pipeline_mode = #tpu.pipeline_mode<synchronous>, transform_indices = @transform_3, window_bounds = array<i64: 1, 128>}, {pipeline_mode = #tpu.pipeline_mode<synchronous>, transform_indices = @transform_4, window_bounds = array<i64: 1, 128>}, {transform_indices = @transform_5, window_bounds = array<i64: 1, 1, 1>}, {transform_indices = @transform_6, window_bounds = array<i64: 1, 1, 1>}]} {
    %c0_i32 = arith.constant 0 : i32
    %0 = arith.cmpi eq, %arg1, %c0_i32 : i32
    %1 = arith.extui %0 : i1 to i32
    %c0_i32_0 = arith.constant 0 : i32
    %2 = arith.cmpi ne, %1, %c0_i32_0 : i32
    scf.if %2 {
      %cst_37 = arith.constant 0.000000e+00 : f32
      %83 = vector.broadcast %cst_37 : f32 to vector<1x1x1xf32>
      %c0_38 = arith.constant 0 : index
      %c0_39 = arith.constant 0 : index
      %c0_40 = arith.constant 0 : index
      %84 = vector.load %arg7[%c0_38, %c0_39, %c0_40] : memref<1x1x1xf32, #tpu.memory_space<vmem>>, vector<1x1x1xf32>
      tpu.vector_store %arg7[%c0_38, %c0_39, %c0_40], %83 {strides = array<i32>} : memref<1x1x1xf32, #tpu.memory_space<vmem>>, vector<1x1x1xf32>,
      %cst_41 = arith.constant 0.000000e+00 : f32
      %85 = vector.broadcast %cst_41 : f32 to vector<1x1x1xf32>
      %c0_42 = arith.constant 0 : index
      %c0_43 = arith.constant 0 : index
      %c0_44 = arith.constant 0 : index
      %86 = vector.load %arg8[%c0_42, %c0_43, %c0_44] : memref<1x1x1xf32, #tpu.memory_space<vmem>>, vector<1x1x1xf32>
      tpu.vector_store %arg8[%c0_42, %c0_43, %c0_44], %85 {strides = array<i32>} : memref<1x1x1xf32, #tpu.memory_space<vmem>>, vector<1x1x1xf32>,
    } else {
    }
    %c1_i32 = arith.constant 1 : i32
    %3 = arith.muli %arg0, %c1_i32 : i32
    %4 = arith.addi %3, %arg1 : i32
    %5 = tpu.iota {dimensions = array<i32: 0>} : vector<8x1xi32>
    %c8_i32 = arith.constant 8 : i32
    %6 = arith.muli %4, %c8_i32 : i32
    %7 = vector.broadcast %6 : i32 to vector<8x1xi32>
    %8 = arith.addi %5, %7 : vector<8x1xi32>
    %c8_i32_1 = arith.constant 8 : i32
    %9 = vector.broadcast %c8_i32_1 : i32 to vector<8x1xi32>
    %10 = arith.cmpi slt, %8, %9 : vector<8x1xi32>
    %11 = arith.extui %10 : vector<8x1xi1> to vector<8x1xi32>
    %12 = arith.sitofp %11 : vector<8x1xi32> to vector<8x1xf32>
    %c0 = arith.constant 0 : index
    %c0_2 = arith.constant 0 : index
    %13 = vector.load %arg2[%c0, %c0_2] : memref<8x32xf32, #tpu.memory_space<vmem>>, vector<8x32xf32>
    %14 = arith.mulf %13, %13 : vector<8x32xf32>
    %cst = arith.constant dense<0.000000e+00> : vector<8xf32>
    %15 = vector.multi_reduction <add>, %14, %cst [1] : vector<8x32xf32> to vector<8xf32>
    %16 = vector.shape_cast %15 : vector<8xf32> to vector<8x1xf32>
    %cst_3 = arith.constant 9.99999996E-13 : f32
    %17 = vector.broadcast %cst_3 : f32 to vector<8x1xf32>
    %18 = arith.addf %16, %17 : vector<8x1xf32>
    %19 = math.rsqrt %18 : vector<8x1xf32>
    %20 = vector.broadcast %19 : vector<8x1xf32> to vector<8x32xf32>
    %21 = arith.mulf %13, %20 : vector<8x32xf32>
    %c0_4 = arith.constant 0 : index
    %c0_5 = arith.constant 0 : index
    %22 = vector.load %arg3[%c0_4, %c0_5] : memref<32x128xf32, #tpu.memory_space<vmem>>, vector<32x128xf32>
    %cst_6 = arith.constant dense<0.000000e+00> : vector<8x128xf32>
    %23 = tpu.matmul %21, %22, %cst_6 {dimension_numbers = #tpu.dot_dimension_numbers<[1], [0], [0], [1], [0, 0, 1, 1], [], []>} : vector<8x32xf32>, vector<32x128xf32>, vector<8x128xf32> -> vector<8x128xf32>
    %c0_7 = arith.constant 0 : index
    %c0_8 = arith.constant 0 : index
    %24 = vector.load %arg4[%c0_7, %c0_8] : memref<8x1xi32, #tpu.memory_space<vmem>>, vector<8x1xi32>
    %25 = tpu.iota {dimensions = array<i32: 1>} : vector<8x128xi32>
    %26 = vector.broadcast %24 : vector<8x1xi32> to vector<8x128xi32>
    %27 = arith.cmpi eq, %25, %26 : vector<8x128xi32>
    %28 = arith.extui %27 : vector<8x128xi1> to vector<8x128xi32>
    %29 = arith.sitofp %28 : vector<8x128xi32> to vector<8x128xf32>
    %30 = arith.mulf %23, %29 : vector<8x128xf32>
    %cst_9 = arith.constant dense<0.000000e+00> : vector<8xf32>
    %31 = vector.multi_reduction <add>, %30, %cst_9 [1] : vector<8x128xf32> to vector<8xf32>
    %32 = vector.shape_cast %31 : vector<8xf32> to vector<8x1xf32>
    %c0_10 = arith.constant 0 : index
    %c0_11 = arith.constant 0 : index
    %33 = vector.load %arg5[%c0_10, %c0_11] : memref<1x128xf32, #tpu.memory_space<vmem>>, vector<1x128xf32>
    %34 = vector.broadcast %33 : vector<1x128xf32> to vector<8x128xf32>
    %35 = arith.mulf %23, %34 : vector<8x128xf32>
    %c0_12 = arith.constant 0 : index
    %c0_13 = arith.constant 0 : index
    %36 = vector.load %arg6[%c0_12, %c0_13] : memref<1x128xf32, #tpu.memory_space<vmem>>, vector<1x128xf32>
    %37 = vector.broadcast %36 : vector<1x128xf32> to vector<8x128xf32>
    %38 = arith.addf %35, %37 : vector<8x128xf32>
    %39 = math.exp %38 : vector<8x128xf32>
    %cst_14 = arith.constant dense<0.000000e+00> : vector<8xf32>
    %40 = vector.multi_reduction <add>, %39, %cst_14 [1] : vector<8x128xf32> to vector<8xf32>
    %41 = vector.shape_cast %40 : vector<8xf32> to vector<8x1xf32>
    %cst_15 = arith.constant 9.99999993E-9 : f32
    %42 = vector.broadcast %cst_15 : f32 to vector<8x1xf32>
    %43 = arith.addf %41, %42 : vector<8x1xf32>
    %44 = math.log %43 : vector<8x1xf32>
    %cst_16 = arith.constant 2.000000e+00 : f32
    %45 = vector.broadcast %cst_16 : f32 to vector<8x1xf32>
    %46 = arith.mulf %32, %45 : vector<8x1xf32>
    %47 = arith.subf %44, %46 : vector<8x1xf32>
    %c6_i32 = arith.constant 6 : i32
    %48 = vector.broadcast %c6_i32 : i32 to vector<8x128xi32>
    %49 = arith.cmpi slt, %25, %48 : vector<8x128xi32>
    %cst_17 = arith.constant -1.000000e+30 : f32
    %50 = vector.broadcast %cst_17 : f32 to vector<8x128xf32>
    %51 = arith.select %49, %23, %50 : vector<8x128xi1>, vector<8x128xf32>
    %cst_18 = arith.constant dense<0xFF800000> : vector<8xf32>
    %52 = vector.multi_reduction <maximumf>, %51, %cst_18 [1] : vector<8x128xf32> to vector<8xf32>
    %53 = vector.shape_cast %52 : vector<8xf32> to vector<8x1xf32>
    %54 = vector.broadcast %53 : vector<8x1xf32> to vector<8x128xf32>
    %55 = arith.cmpf oeq, %51, %54 : vector<8x128xf32>
    %56 = arith.sitofp %25 : vector<8x128xi32> to vector<8x128xf32>
    %cst_19 = arith.constant 1.000000e+09 : f32
    %57 = vector.broadcast %cst_19 : f32 to vector<8x128xf32>
    %58 = arith.select %55, %56, %57 : vector<8x128xi1>, vector<8x128xf32>
    %cst_20 = arith.constant dense<0x7F800000> : vector<8xf32>
    %59 = vector.multi_reduction <minimumf>, %58, %cst_20 [1] : vector<8x128xf32> to vector<8xf32>
    %60 = vector.shape_cast %59 : vector<8xf32> to vector<8x1xf32>
    %61 = arith.sitofp %24 : vector<8x1xi32> to vector<8x1xf32>
    %62 = arith.cmpf oeq, %60, %61 : vector<8x1xf32>
    %63 = arith.extui %62 : vector<8x1xi1> to vector<8x1xi32>
    %64 = arith.sitofp %63 : vector<8x1xi32> to vector<8x1xf32>
    %65 = arith.mulf %47, %12 : vector<8x1xf32>
    %cst_21 = arith.constant dense<0.000000e+00> : vector<1xf32>
    %66 = vector.multi_reduction <add>, %65, %cst_21 [0] : vector<8x1xf32> to vector<1xf32>
    %67 = vector.shape_cast %66 : vector<1xf32> to vector<1x1xf32>
    %68 = arith.mulf %64, %12 : vector<8x1xf32>
    %cst_22 = arith.constant dense<0.000000e+00> : vector<1xf32>
    %69 = vector.multi_reduction <add>, %68, %cst_22 [0] : vector<8x1xf32> to vector<1xf32>
    %70 = vector.shape_cast %69 : vector<1xf32> to vector<1x1xf32>
    %c0_23 = arith.constant 0 : index
    %c0_24 = arith.constant 0 : index
    %c0_25 = arith.constant 0 : index
    %71 = vector.load %arg7[%c0_23, %c0_24, %c0_25] : memref<1x1x1xf32, #tpu.memory_space<vmem>>, vector<1x1x1xf32>
    %72 = vector.shape_cast %67 : vector<1x1xf32> to vector<1x1x1xf32>
    %cst_26 = arith.constant 1.250000e-01 : f32
    %73 = vector.broadcast %cst_26 : f32 to vector<1x1x1xf32>
    %74 = arith.mulf %72, %73 : vector<1x1x1xf32>
    %75 = arith.addf %71, %74 : vector<1x1x1xf32>
    %c0_27 = arith.constant 0 : index
    %c0_28 = arith.constant 0 : index
    %c0_29 = arith.constant 0 : index
    %76 = vector.load %arg7[%c0_27, %c0_28, %c0_29] : memref<1x1x1xf32, #tpu.memory_space<vmem>>, vector<1x1x1xf32>
    tpu.vector_store %arg7[%c0_27, %c0_28, %c0_29], %75 {strides = array<i32>} : memref<1x1x1xf32, #tpu.memory_space<vmem>>, vector<1x1x1xf32>,
    %c0_30 = arith.constant 0 : index
    %c0_31 = arith.constant 0 : index
    %c0_32 = arith.constant 0 : index
    %77 = vector.load %arg8[%c0_30, %c0_31, %c0_32] : memref<1x1x1xf32, #tpu.memory_space<vmem>>, vector<1x1x1xf32>
    %78 = vector.shape_cast %70 : vector<1x1xf32> to vector<1x1x1xf32>
    %cst_33 = arith.constant 1.250000e-01 : f32
    %79 = vector.broadcast %cst_33 : f32 to vector<1x1x1xf32>
    %80 = arith.mulf %78, %79 : vector<1x1x1xf32>
    %81 = arith.addf %77, %80 : vector<1x1x1xf32>
    %c0_34 = arith.constant 0 : index
    %c0_35 = arith.constant 0 : index
    %c0_36 = arith.constant 0 : index
    %82 = vector.load %arg8[%c0_34, %c0_35, %c0_36] : memref<1x1x1xf32, #tpu.memory_space<vmem>>, vector<1x1x1xf32>
    tpu.vector_store %arg8[%c0_34, %c0_35, %c0_36], %81 {strides = array<i32>} : memref<1x1x1xf32, #tpu.memory_space<vmem>>, vector<1x1x1xf32>,
    return
  }
  func.func @transform_0(%arg0: i32, %arg1: i32) -> (i32, i32) {
    %c1_i32 = arith.constant 1 : i32
    %0 = arith.muli %arg0, %c1_i32 : i32
    %1 = arith.addi %0, %arg1 : i32
    %c0_i32 = arith.constant 0 : i32
    %c0_i32_0 = arith.constant 0 : i32
    return %1, %c0_i32 : i32, i32
  }
  func.func @transform_1(%arg0: i32, %arg1: i32) -> (i32, i32) {
    %c0_i32 = arith.constant 0 : i32
    %c0_i32_0 = arith.constant 0 : i32
    %c0_i32_1 = arith.constant 0 : i32
    return %c0_i32, %c0_i32_0 : i32, i32
  }
  func.func @transform_2(%arg0: i32, %arg1: i32) -> (i32, i32) {
    %c1_i32 = arith.constant 1 : i32
    %0 = arith.muli %arg0, %c1_i32 : i32
    %1 = arith.addi %0, %arg1 : i32
    %c0_i32 = arith.constant 0 : i32
    %c0_i32_0 = arith.constant 0 : i32
    return %1, %c0_i32 : i32, i32
  }
  func.func @transform_3(%arg0: i32, %arg1: i32) -> (i32, i32) {
    %c0_i32 = arith.constant 0 : i32
    %c0_i32_0 = arith.constant 0 : i32
    %c0_i32_1 = arith.constant 0 : i32
    return %c0_i32, %c0_i32_0 : i32, i32
  }
  func.func @transform_4(%arg0: i32, %arg1: i32) -> (i32, i32) {
    %c0_i32 = arith.constant 0 : i32
    %c0_i32_0 = arith.constant 0 : i32
    %c0_i32_1 = arith.constant 0 : i32
    return %c0_i32, %c0_i32_0 : i32, i32
  }
  func.func @transform_5(%arg0: i32, %arg1: i32) -> (i32, i32, i32) {
    %c0_i32 = arith.constant 0 : i32
    %c0_i32_0 = arith.constant 0 : i32
    %c0_i32_1 = arith.constant 0 : i32
    return %arg0, %c0_i32, %c0_i32_0 : i32, i32, i32
  }
  func.func @transform_6(%arg0: i32, %arg1: i32) -> (i32, i32, i32) {
    %c0_i32 = arith.constant 0 : i32
    %c0_i32_0 = arith.constant 0 : i32
    %c0_i32_1 = arith.constant 0 : i32
    return %arg0, %c0_i32, %c0_i32_0 : i32, i32, i32
  }
}

</mosaic_0001>

<llo_original>
// kernel: tpu_custom_call.1
$region0: #{tpu_custom_call.1}
  #allocation0 [shape = 'u32[]', space=smem, size = 0x4, offset = 0x4, fixed_abs, tag = 'smem constant byte address 0x4 - core index']
  #allocation1 [shape = 'u32[144,128]{1,0:T(1,128)}', space=vmem, size = 0x12000, scoped, tag = 'internal scratch']
  %s0 = inlined_call_operand.vmem [shape: f32[8,32], index: 0, kind: input, shape index: {}]
  %s1 = inlined_call_operand.hbm [shape: f32[32,128], index: 1, kind: input, shape index: {}]
  %s2 = inlined_call_operand.vmem [shape: s32[8,1], index: 2, kind: input, shape index: {}]
  %s3 = inlined_call_operand.vmem [shape: f32[1,128], index: 3, kind: input, shape index: {}]
  %s4 = inlined_call_operand.vmem [shape: f32[1,128], index: 4, kind: input, shape index: {}]
  %s5 = inlined_call_operand.hbm [shape: f32[1,1,1], index: 5, kind: output, shape index: {0}]
  %s6 = inlined_call_operand.hbm [shape: f32[1,1,1], index: 6, kind: output, shape index: {1}]
  %7 = xla_tuple %s5, %s6
  %s8 = sld [smem:[#allocation0]]
  $region46: #{tpu_custom_call.1} parent=0
    _
  %s10 = ssub.s32 1, %s8
  %s11 = scalar_select 0, %s10, %s8
  $region1: #{tpu_custom_call.1} parent=0
    #allocation2 [shape = 'u8[16384]{0}', space=vmem, size = 0x4000, scoped, tag = 'input window, operand 1, single buffered']
    #allocation3 [shape = 's32[1]{0}', space=sflag, size = 0x4, scoped, tag = 'scoped memory for tpu_custom_call.1']
    #allocation4 [shape = 's32[1]{0}', space=sflag, size = 0x4, scoped, tag = 'scoped memory for tpu_custom_call.1']
    #allocation5 [shape = 'u8[512]{0}', space=vmem, size = 0x400, scoped, tag = 'output window, operand 0, single buffered']
    #allocation6 [shape = 'u8[512]{0}', space=vmem, size = 0x400, scoped, tag = 'output window, operand 1, single buffered']
    #allocation7 [shape = 's32[1]{0}', space=sflag, size = 0x4, scoped, tag = 'scoped memory for tpu_custom_call.1']
    %12 = vsyncpa [#allocation3], 0
    %13 = vsyncpa [#allocation4], 0
    %14 = vsyncpa [#allocation7], 0
    // Predicated region
    $region2: #{tpu_custom_call.1} parent=1 // pred_check
      _
    $region3: #{tpu_custom_call.1} parent=1 // pred_check_branch
      %16 = sbr.rel (0) target = $region5
    $region4: #{tpu_custom_call.1} parent=1 // pred_region
      %s17 = sadd.s32 0, 0
      %p18 = scmp.lt.s32.totalorder %s17, 0
      %s19 = scalar_select %p18, %s17, 0
      %s20 = smul.addr %s19, 8
      %s21 = scalar_lea.vmem %s0, %s20
      %s22 = sadd.s32 0, 0
    $region5: #{tpu_custom_call.1} parent=1 // pred_fallthru
      _
    // Predicated region
    $region6: #{tpu_custom_call.1} parent=1 // pred_check
      _
    $region7: #{tpu_custom_call.1} parent=1 // pred_check_branch
      %24 = sbr.rel (0) target = $region9
    $region8: #{tpu_custom_call.1} parent=1 // pred_region
      %s26 = ssub.s32 512, 512
      %27 = vsyncadd [#allocation3], %s26
      %s28 = sshll.u32 [#allocation2], 4
      %s29 = int_to_ptr.vmem [resolvable:$true] %s28
      %34 = dma.hbm_to_vmem [thread:$0]  %s1, 512, %s29, [#allocation3], 128, 128, 8
    $region9: #{tpu_custom_call.1} parent=1 // pred_fallthru
      _
    // Predicated region
    $region10: #{tpu_custom_call.1} parent=1 // pred_check
      _
    $region11: #{tpu_custom_call.1} parent=1 // pred_check_branch
      %36 = sbr.rel (0) target = $region13
    $region12: #{tpu_custom_call.1} parent=1 // pred_region
      %s37 = sadd.s32 0, 0
      %p38 = scmp.lt.s32.totalorder %s37, 0
      %s39 = scalar_select %p38, %s37, 0
      %s40 = smul.addr %s39, 8
      %s41 = scalar_lea.vmem %s2, %s40
      %s42 = sadd.s32 0, 0
    $region13: #{tpu_custom_call.1} parent=1 // pred_fallthru
      _
    // Predicated region
    $region14: #{tpu_custom_call.1} parent=1 // pred_check
      _
    $region15: #{tpu_custom_call.1} parent=1 // pred_check_branch
      %44 = sbr.rel (0) target = $region17
    $region16: #{tpu_custom_call.1} parent=1 // pred_region
      _
    $region17: #{tpu_custom_call.1} parent=1 // pred_fallthru
      _
    // Predicated region
    $region18: #{tpu_custom_call.1} parent=1 // pred_check
      _
    $region19: #{tpu_custom_call.1} parent=1 // pred_check_branch
      %46 = sbr.rel (0) target = $region21
    $region20: #{tpu_custom_call.1} parent=1 // pred_region
      _
    $region21: #{tpu_custom_call.1} parent=1 // pred_fallthru
      _
    // Predicated region
    $region22: #{tpu_custom_call.1} parent=1 // pred_check
      _
    $region23: #{tpu_custom_call.1} parent=1 // pred_check_branch
      %48 = sbr.rel (0) target = $region25
    $region24: #{tpu_custom_call.1} parent=1 // pred_region
      %49 = dma.done [#allocation3], 512
    $region25: #{tpu_custom_call.1} parent=1 // pred_fallthru
      _
    %s50 = sadd.s32 0, 0
    %p51 = scmp.lt.s32.totalorder %s50, 0
    %s52 = scalar_select %p51, %s50, 0
    %s53 = smul.addr %s52, 8
    %s54 = scalar_lea.vmem %s0, %s53
    %s55 = sadd.s32 0, 0
    %p56 = scmp.lt.s32.totalorder %s55, 0
    %s57 = scalar_select %p56, %s55, 0
    %s58 = smul.addr %s57, 8
    %s59 = scalar_lea.vmem %s2, %s58
    %s60 = sadd.s32 0, 0
    %p61 = scmp.lt.s32.totalorder %s60, 0
    %s62 = scalar_select %p61, %s60, 0
    %s63 = smul.addr %s62, 8
    %s64 = scalar_lea.vmem %s0, %s63
    %s65 = sadd.s32 0, 0
    %s66 = sadd.s32 0, 0
    %p67 = scmp.lt.s32.totalorder %s66, 0
    %s68 = scalar_select %p67, %s66, 0
    %s69 = smul.addr %s68, 8
    %s70 = scalar_lea.vmem %s2, %s69
    %s71 = sadd.s32 0, 0
    %p72 = scmp.eq.s32.totalorder 0, 0
    // Predicated region
    $region26: #{tpu_custom_call.1} parent=1 // pred_check
      %p73 = pneg %p72
    $region27: #{tpu_custom_call.1} parent=1 // pred_check_branch
      %75 = sbr.rel (%p73) target = $region29
    $region28: #{tpu_custom_call.1} parent=1 // pred_region
      %vm76 = vcmask 0
      %77 = vst.msk [vmem:[#allocation5] sm:$0x1] %vm76, 0.0
      %78 = vst.msk [vmem:[#allocation6] sm:$0x1] %vm76, 0.0
    $region29: #{tpu_custom_call.1} parent=1 // pred_fallthru
      _
    %s79 = sadd.s32 0, 0
    %v80 = vlaneseq
    %v81 = vshrl.u32 %v80, 7
    %s82 = smul.u32 %s79, 8
    %v83 = vstv %s82
    %v84 = vadd.s32 %v81, %v83
    %vm85 = vcmp.lt.s32.totalorder %v84, 8
    %v86 = vsel %vm85, 1, 0
    %v87 = vcvt.s32.f32 %v86
    %v88 = vld [vmem:[%s64] sm:$0xff]
    %v89 = vmul.f32 %v88, %v88
    %vm90 = vcmask 261120
    %v91 = vsel %vm90, %v89, 0.0
    %92 = vadd.xlane.f32.xlu0 %v91
    %v93 = vpop.xlane.xlu0 %92
    %v94 = vadd.f32 %v93, 1e-12
    %v95 = vrsqrt.pop %v94
    %v96 = vmul.f32 %v88, %v95
    %v97 = vld [vmem:[#allocation2] sm:$0xff]
    %v98 = vld [vmem:[#allocation2 + $0x8] sm:$0xff]
    %v99 = vld [vmem:[#allocation2 + $0x10] sm:$0xff]
    %v100 = vld [vmem:[#allocation2 + $0x18] sm:$0xff]
    %v102 = vsel %vm90, %v96, 0
    %104 = vmatprep.subr.mxu0 0.0
    %105 = vmatpush1.msra.mxu0 %v97
    %106 = vmatprep.subr.mxu0 0.0
    %107 = vmatpush1.msra.mxu0 %v98
    %108 = vmatprep.subr.mxu0 0.0
    %109 = vmatpush1.msra.mxu0 %v99
    %110 = vmatprep.subr.mxu0 0.0
    %111 = vmatpush1.msra.mxu0 %v100
    %112 = vmatprep.subr.mxu0 0.0
    %113 = vmatpush1.msra.mxu0 0.0
    %114 = vmatprep.subr.mxu0 0.0
    %115 = vmatpush1.msra.mxu0 0.0
    %116 = vmatprep.subr.mxu0 0.0
    %117 = vmatpush1.msra.mxu0 0.0
    %118 = vmatprep.subr.mxu0 0.0
    %119 = vmatpush1.msra.mxu0 0.0
    %120 = vmatprep.subr.mxu0 0.0
    %121 = vmatpush1.msra.mxu0 0.0
    %122 = vmatprep.subr.mxu0 0.0
    %123 = vmatpush1.msra.mxu0 0.0
    %124 = vmatprep.subr.mxu0 0.0
    %125 = vmatpush1.msra.mxu0 0.0
    %126 = vmatprep.subr.mxu0 0.0
    %127 = vmatpush1.msra.mxu0 0.0
    %128 = vmatprep.subr.mxu0 0.0
    %129 = vmatpush1.msra.mxu0 0.0
    %130 = vmatprep.subr.mxu0 0.0
    %131 = vmatpush1.msra.mxu0 0.0
    %132 = vmatprep.subr.mxu0 0.0
    %133 = vmatpush1.msra.mxu0 0.0
    %134 = vmatprep.subr.mxu0 0.0
    %135 = vmatpush1.msra.mxu0 0.0
    %136 = vmatprep.subr.mxu0 0.0
    %137 = vmatpush1.msra.mxu0 0.0
    %138 = vmatprep.subr.mxu0 0.0
    %139 = vmatpush1.msra.mxu0 0.0
    %140 = vmatprep.subr.mxu0 0.0
    %141 = vmatpush1.msra.mxu0 0.0
    %142 = vmatprep.subr.mxu0 0.0
    %143 = vmatpush1.msra.mxu0 0.0
    %144 = vmatprep.subr.mxu0 0.0
    %145 = vmatpush1.msra.mxu0 0.0
    %146 = vmatprep.subr.mxu0 0.0
    %147 = vmatpush1.msra.mxu0 0.0
    %148 = vmatprep.subr.mxu0 0.0
    %149 = vmatpush1.msra.mxu0 0.0
    %150 = vmatprep.subr.mxu0 0.0
    %151 = vmatpush1.msra.mxu0 0.0
    %152 = vmatprep.subr.mxu0 0.0
    %153 = vmatpush1.msra.mxu0 0.0
    %154 = vmatprep.subr.mxu0 0.0
    %155 = vmatpush1.msra.mxu0 0.0
    %156 = vmatprep.subr.mxu0 0.0
    %157 = vmatpush1.msra.mxu0 0.0
    %158 = vmatprep.subr.mxu0 0.0
    %159 = vmatpush1.msra.mxu0 0.0
    %160 = vmatprep.subr.mxu0 0.0
    %161 = vmatpush1.msra.mxu0 0.0
    %162 = vmatprep.subr.mxu0 0.0
    %163 = vmatpush1.msra.mxu0 0.0
    %164 = vmatprep.subr.mxu0 0.0
    %165 = vmatpush1.msra.mxu0 0.0
    %166 = vmatprep.subr.mxu0 0.0
    %167 = vmatpush1.msra.mxu0 0.0
    %168 = vmatprep.mubr.f32.mxu0 0.0
    %169 = vmatmul.mubr.f32.gmra.mrb[0].mxu0 %v102
    %v170 = vpop.f32.mrb[0].mxu0
    %v171 = vadd.f32 0.0, %v170
    %v172 = vpop.f32.mrb[0].mxu0
    %173 = vdwg.mxu0
    %v174 = vld [vmem:[%s70] sm:$0xff]
    %v175 = vlaneseq
    %v176 = vand.u32 %v175, 127
    %177 = vset.pattern.permute.xlu0 0
    %178 = vperm.xlu0 %177, %v174
    %v179 = vpop.permute.xlu0 %178
    %vm180 = vcmp.eq.s32.totalorder %v176, %v179
    %v181 = vsel %vm180, 1, 0
    %v182 = vcvt.s32.f32 %v181
    %v183 = vmul.f32 %v171, %v182
    %184 = vadd.xlane.f32.xlu0 %v183
    %v185 = vpop.xlane.xlu0 %184
    %v186 = vld [vmem:[%s3] sm:$0x1]
    %v188 = vlaneseq
    %v189 = vshrl.u32 %v188, 7
    %v190 = vsub.s32 0, %v189
    %v191 = vrot.slane %v186, %v190
    %v193 = vmul.f32 %v171, %v191
    %v194 = vld [vmem:[%s4] sm:$0x1]
    %v196 = vlaneseq
    %v197 = vshrl.u32 %v196, 7
    %v198 = vsub.s32 0, %v197
    %v199 = vrot.slane %v194, %v198
    %v201 = vadd.f32 %v193, %v199
    %v202 = vmul.f32 %v201, 1.442695
    %v203 = vpow.pop %v202
    %204 = vadd.xlane.f32.xlu0 %v203
    %v205 = vpop.xlane.xlu0 %204
    %v206 = vadd.f32 %v205, 1e-08
    %v207 = vlog2.pop %v206
    %v208 = vmul.f32 %v207, 0.6931472
    %v209 = vmul.f32 %v185, 2.0
    %v210 = vsub.f32 %v208, %v209
    %vm211 = vcmp.lt.s32.totalorder %v176, 6
    %v212 = vsel %vm211, %v171, -1e+30
    %213 = vmax.xlane.f32.xlu0 %v212
    %v214 = vpop.xlane.xlu0 %213
    %vm215 = vcmp.eq.f32.partialorder %v212, %v214
    %v216 = vcvt.s32.f32 %v176
    %v217 = vsel %vm215, %v216, 1e+09
    %218 = vmin.xlane.f32.xlu0 %v217
    %v219 = vpop.xlane.xlu0 %218
    %v220 = vcvt.s32.f32 %v174
    %vm221 = vcmp.eq.f32.partialorder %v219, %v220
    %v222 = vsel %vm221, 1, 0
    %v223 = vcvt.s32.f32 %v222
    %v224 = vmul.f32 %v210, %v87
    %v225 = vrot.slane %v224, 4
    %v226 = vadd.f32 %v224, %v225
    %v227 = vrot.slane %v226, 2
    %v228 = vadd.f32 %v226, %v227
    %v229 = vrot.slane %v228, 1
    %v230 = vadd.f32 %v228, %v229
    %v231 = vmul.f32 %v223, %v87
    %vm232 = vcmask 7168
    %v233 = vsel %vm232, %v231, 0.0
    %v234 = vrot.slane %v233, 4
    %v235 = vadd.f32 %v233, %v234
    %v236 = vrot.slane %v235, 2
    %v237 = vadd.f32 %v235, %v236
    %v238 = vrot.slane %v237, 1
    %v239 = vadd.f32 %v237, %v238
    %v240 = vld [vmem:[#allocation5] sm:$0x1]
    %v241 = vmul.f32 %v230, 0.125
    %v242 = vadd.f32 %v240, %v241
    %vm243 = vcmask 0
    %244 = vst.msk [vmem:[#allocation5] sm:$0x1] %vm243, %v242
    %v245 = vld [vmem:[#allocation6] sm:$0x1]
    %v246 = vmul.f32 %v239, 0.125
    %v247 = vadd.f32 %v245, %v246
    %248 = vst.msk [vmem:[#allocation6] sm:$0x1] %vm243, %v247
    // Predicated region
    $region30: #{tpu_custom_call.1} parent=1 // pred_check
      _
    $region31: #{tpu_custom_call.1} parent=1 // pred_check_branch
      %250 = sbr.rel (0) target = $region33
    $region32: #{tpu_custom_call.1} parent=1 // pred_region
      %s252 = ssub.s32 16, 16
      %253 = vsyncadd [#allocation4], %s252
      %s255 = sshll.u32 [#allocation5], 4
      %s256 = int_to_ptr.vmem [resolvable:$true] %s255
      %258 = dma.vmem_to_hbm [thread:$0]  %s256, 16, %s5, [#allocation4]
    $region33: #{tpu_custom_call.1} parent=1 // pred_fallthru
      _
    // Predicated region
    $region34: #{tpu_custom_call.1} parent=1 // pred_check
      _
    $region35: #{tpu_custom_call.1} parent=1 // pred_check_branch
      %260 = sbr.rel (0) target = $region37
    $region36: #{tpu_custom_call.1} parent=1 // pred_region
      %s262 = ssub.s32 16, 16
      %263 = vsyncadd [#allocation7], %s262
      %s265 = sshll.u32 [#allocation6], 4
      %s266 = int_to_ptr.vmem [resolvable:$true] %s265
      %268 = dma.vmem_to_hbm [thread:$0]  %s266, 16, %s6, [#allocation7]
    $region37: #{tpu_custom_call.1} parent=1 // pred_fallthru
      _
    // Predicated region
    $region38: #{tpu_custom_call.1} parent=1 // pred_check
      _
    $region39: #{tpu_custom_call.1} parent=1 // pred_check_branch
      %270 = sbr.rel (0) target = $region41
    $region40: #{tpu_custom_call.1} parent=1 // pred_region
      %271 = dma.done [#allocation4], 16
    $region41: #{tpu_custom_call.1} parent=1 // pred_fallthru
      _
    // Predicated region
    $region42: #{tpu_custom_call.1} parent=1 // pred_check
      _
    $region43: #{tpu_custom_call.1} parent=1 // pred_check_branch
      %273 = sbr.rel (0) target = $region45
    $region44: #{tpu_custom_call.1} parent=1 // pred_region
      %274 = dma.done [#allocation7], 16
    $region45: #{tpu_custom_call.1} parent=1 // pred_fallthru
      _
    %275 = vsyncpa [#allocation3], 1
    %276 = vsyncpa [#allocation4], 1
    %277 = vsyncpa [#allocation7], 1

</llo_original>
